<compile_context>
chip_gen: v6e
topology: v6e:2x2x1
jax: 0.10.0
libtpu: 0.0.40
codegen_flags: <defaults>
</compile_context>

<pallas_src>
import functools
import math

import jax
import jax.numpy as jnp
from jax.experimental import pallas as pl
from jax.experimental.pallas import tpu as pltpu


# Explicit, bounded scoped-VMEM request: safe on v5e/v6e (128 MiB physical)
# and on v7x (64 MiB physical); our tiles need far less than this.
_VMEM_LIMIT_BYTES = 32 * 1024 * 1024


def _round_up(n, m):
    return ((n + m - 1) // m) * m


def _choose_pair_tile(n_pairs, n_atoms):
    # Bound the in-kernel (n_atoms, tile_p) f32 selection matrix to ~8 MiB.
    budget_cols = max(128, ((8 * 1024 * 1024 // 4) // max(n_atoms, 1)) // 128 * 128)
    tile = min(1024, budget_cols)
    if n_pairs <= tile:
        tile = _round_up(max(n_pairs, 1), 128)
    return tile


# --------------------------------- kernels ----------------------------------


def _features_kernel(max_norm, z_ref, emb_ref, feat_ref):
    """Embedding lookup (one-hot @ table on the MXU) + max_norm rescale."""
    tile_a = z_ref.shape[0]
    n_vocab = emb_ref.shape[0]
    z = z_ref[...]                                                  # (tile_a, 1) int32
    onehot = (jax.lax.broadcasted_iota(jnp.int32, (tile_a, n_vocab), 1)
              == z).astype(jnp.float32)                             # (tile_a, n_vocab)
    feats = jnp.dot(onehot, emb_ref[...],
                    preferred_element_type=jnp.float32)             # (tile_a, n_basis)
    # torch.nn.Embedding(max_norm=...) renormalizes accessed rows whose L2 norm
    # exceeds max_norm.  Forward value only.
    # TODO(synk): torch renormalizes the weight table in place (training side
    # effect); only the forward output is reproduced here.
    sumsq = jnp.sum(feats * feats, axis=-1, keepdims=True)
    scale = jnp.minimum(1.0, max_norm / (jnp.sqrt(sumsq) + 1e-7))
    feat_ref[...] = feats * scale


def _pairs_kernel(inv_cutoff, idx_i_ref, idx_j_ref, posT_ref,
                  centers_ref, widths_ref, dc_ref, rbfT_ref):
    """Short-range pairs: distance, Poly6 cutoff, Gaussian RBF (transposed)."""
    n_atoms = posT_ref.shape[1]
    tile_p = idx_i_ref.shape[1]

    # Single signed selection matrix: column p has +1 at atom j(p), -1 at i(p).
    # Built from two compares so that i == j pairs stay exactly zero.
    a_iota = jax.lax.broadcasted_iota(jnp.int32, (n_atoms, tile_p), 0)
    sel = ((a_iota == idx_j_ref[...]).astype(jnp.float32)
           - (a_iota == idx_i_ref[...]).astype(jnp.float32))        # (n_atoms, tile_p)

    # positions[idx_j] - positions[idx_i], pairs along lanes: (3, tile_p)
    dvec = jnp.dot(posT_ref[...], sel, preferred_element_type=jnp.float32)
    d2 = (dvec[0:1, :] * dvec[0:1, :]
          + dvec[1:2, :] * dvec[1:2, :]
          + dvec[2:3, :] * dvec[2:3, :])
    dist = jnp.sqrt(d2)                                             # (1, tile_p)

    # Poly6 cutoff, Horner form: 1 - 6x^5 + 15x^4 - 10x^3.
    x = dist * inv_cutoff
    poly = 1.0 + x * x * x * (-10.0 + x * (15.0 - 6.0 * x))
    cut = jnp.where(x < 1.0, poly, 0.0)

    # Lane-dense packed output slab: row 0 = distance, row 1 = cutoff.
    dc_ref[0:1, :] = dist
    dc_ref[1:2, :] = cut

    # Gaussian RBF, transposed orientation (n_rbf, tile_p) -> lane-dense store.
    # TODO(synk): verify exact asparagus GaussianRBF width parameterization.
    delta = dist - centers_ref[...]
    rbfT_ref[...] = jnp.exp(-widths_ref[...] * delta * delta)


def _uv_kernel(idx_u_ref, idx_v_ref, posT_ref, d_ref):
    """Long-range pair distances only (lane-dense (1, tile) output)."""
    n_atoms = posT_ref.shape[1]
    tile_p = idx_u_ref.shape[1]
    a_iota = jax.lax.broadcasted_iota(jnp.int32, (n_atoms, tile_p), 0)
    sel = ((a_iota == idx_u_ref[...]).astype(jnp.float32)
           - (a_iota == idx_v_ref[...]).astype(jnp.float32))
    dvec = jnp.dot(posT_ref[...], sel, preferred_element_type=jnp.float32)
    d2 = (dvec[0:1, :] * dvec[0:1, :]
          + dvec[1:2, :] * dvec[1:2, :]
          + dvec[2:3, :] * dvec[2:3, :])
    d_ref[...] = jnp.sqrt(d2)


# --------------------------------- wrapper -----------------------------------


def init_params(key, n_maxatom=94, n_atombasis=32, n_radialbasis=64,
                center_start=1.0, center_end=8.0):
    emb = jax.random.uniform(key, (n_maxatom + 1, n_atombasis),
                             minval=-math.sqrt(3.0), maxval=math.sqrt(3.0),
                             dtype=jnp.float32)
    emb = emb.at[0].set(0.0)  # padding_idx=0
    centers = jnp.linspace(center_start, center_end, n_radialbasis, dtype=jnp.float32)
    d = (center_end - center_start) / max(n_radialbasis - 1, 1)
    widths = jnp.full((n_radialbasis,), 0.5 / (d * d), dtype=jnp.float32)
    return {"embedding": emb, "rbf_centers": centers, "rbf_widths": widths}


def input_physnet_forward(atomic_numbers, positions, idx_i, idx_j, params,
                          idx_u=None, idx_v=None, radial_cutoff=8.0):
    # TODO(synk): pbc_offset_ij / pbc_offset_uv branches not implemented (None path only).
    n_atoms = atomic_numbers.shape[0]
    n_pairs = idx_i.shape[0]
    emb = params["embedding"].astype(jnp.float32)
    centers = params["rbf_centers"].astype(jnp.float32)
    widths = params["rbf_widths"].astype(jnp.float32)
    n_basis = emb.shape[1]
    n_rbf = centers.shape[0]

    cparams = pltpu.CompilerParams(dimension_semantics=("parallel",),
                                   vmem_limit_bytes=_VMEM_LIMIT_BYTES)

    # ----------------- atomic features (grid over atom tiles) -----------------
    tile_a = 256 if n_atoms >= 256 else _round_up(n_atoms, 8)
    n_atoms_pad = _round_up(n_atoms, tile_a)
    z = jnp.pad(atomic_numbers.astype(jnp.int32).reshape(n_atoms, 1),
                ((0, n_atoms_pad - n_atoms), (0, 0)))
    features = pl.pallas_call(
        functools.partial(_features_kernel, float(n_basis)),
        grid=(n_atoms_pad // tile_a,),
        in_specs=[pl.BlockSpec((tile_a, 1), lambda a: (a, 0)),
                  pl.BlockSpec(emb.shape, lambda a: (0, 0))],
        out_specs=pl.BlockSpec((tile_a, n_basis), lambda a: (a, 0)),
        out_shape=jax.ShapeDtypeStruct((n_atoms_pad, n_basis), jnp.float32),
        compiler_params=cparams,
    )(z, emb)[:n_atoms]

    # --------------- short-range pairs (grid over pair tiles) -----------------
    posT = positions.astype(jnp.float32).T          # (3, n_atoms), broadcast-resident
    centers_c = centers.reshape(n_rbf, 1)
    widths_c = widths.reshape(n_rbf, 1)

    tile_p = _choose_pair_tile(n_pairs, n_atoms)
    n_pairs_pad = _round_up(n_pairs, tile_p)
    ii = jnp.pad(idx_i.astype(jnp.int32).reshape(1, n_pairs),
                 ((0, 0), (0, n_pairs_pad - n_pairs)))
    jj = jnp.pad(idx_j.astype(jnp.int32).reshape(1, n_pairs),
                 ((0, 0), (0, n_pairs_pad - n_pairs)))

    dc, rbfT = pl.pallas_call(
        functools.partial(_pairs_kernel, 1.0 / float(radial_cutoff)),
        grid=(n_pairs_pad // tile_p,),
        in_specs=[pl.BlockSpec((1, tile_p), lambda p: (0, p)),
                  pl.BlockSpec((1, tile_p), lambda p: (0, p)),
                  pl.BlockSpec((3, n_atoms), lambda p: (0, 0)),
                  pl.BlockSpec((n_rbf, 1), lambda p: (0, 0)),
                  pl.BlockSpec((n_rbf, 1), lambda p: (0, 0))],
        out_specs=(pl.BlockSpec((2, tile_p), lambda p: (0, p)),
                   pl.BlockSpec((n_rbf, tile_p), lambda p: (0, p))),
        out_shape=(jax.ShapeDtypeStruct((2, n_pairs_pad), jnp.float32),
                   jax.ShapeDtypeStruct((n_rbf, n_pairs_pad), jnp.float32)),
        compiler_params=cparams,
    )(ii, jj, posT, centers_c, widths_c)

    distances = dc[0, :n_pairs]
    cutoffs = dc[1, :n_pairs]
    rbfs = rbfT[:, :n_pairs].T          # layout plumbing back to (N_pairs, n_rbf)

    # ---------------- long-range pairs (skipped when absent) ------------------
    if idx_u is None or idx_v is None:
        distances_uv = distances        # module semantics: distances_uv == distances
    else:
        n_uv = idx_u.shape[0]
        tile_u = _choose_pair_tile(n_uv, n_atoms)
        n_uv_pad = _round_up(n_uv, tile_u)
        uu = jnp.pad(idx_u.astype(jnp.int32).reshape(1, n_uv),
                     ((0, 0), (0, n_uv_pad - n_uv)))
        vv = jnp.pad(idx_v.astype(jnp.int32).reshape(1, n_uv),
                     ((0, 0), (0, n_uv_pad - n_uv)))
        duv = pl.pallas_call(
            _uv_kernel,
            grid=(n_uv_pad // tile_u,),
            in_specs=[pl.BlockSpec((1, tile_u), lambda p: (0, p)),
                      pl.BlockSpec((1, tile_u), lambda p: (0, p)),
                      pl.BlockSpec((3, n_atoms), lambda p: (0, 0))],
            out_specs=pl.BlockSpec((1, tile_u), lambda p: (0, p)),
            out_shape=jax.ShapeDtypeStruct((1, n_uv_pad), jnp.float32),
            compiler_params=cparams,
        )(uu, vv, posT)
        distances_uv = duv[0, :n_uv]

    return features, distances, cutoffs, rbfs, distances_uv


# -------------------------------- reference ----------------------------------


def _reference(atomic_numbers, positions, idx_i, idx_j, idx_u, idx_v, params,
               radial_cutoff, max_norm):
    feats = params["embedding"][atomic_numbers]
    norms = jnp.sqrt(jnp.sum(feats * feats, axis=-1, keepdims=True))
    feats = feats * jnp.minimum(1.0, max_norm / (norms + 1e-7))
    d = jnp.linalg.norm(positions[idx_j] - positions[idx_i], axis=-1)
    x = d / radial_cutoff
    cut = jnp.where(x < 1.0, 1.0 - 6.0 * x**5 + 15.0 * x**4 - 10.0 * x**3, 0.0)
    delta = d[:, None] - params["rbf_centers"][None, :]
    rbf = jnp.exp(-params["rbf_widths"][None, :] * delta * delta)
    if idx_u is None or idx_v is None:
        d_uv = d
    else:
        d_uv = jnp.linalg.norm(positions[idx_u] - positions[idx_v], axis=-1)
    return feats, d, cut, rbf, d_uv


if __name__ == "__main__":
    key = jax.random.PRNGKey(0)
    k_emb, k_z, k_pos, k_i, k_j, k_u, k_v = jax.random.split(key, 7)

    n_atoms, n_pairs, n_pairs_uv = 16, 24, 40
    n_atombasis, n_radialbasis, n_maxatom = 32, 64, 94
    radial_cutoff = 8.0

    params = init_params(k_emb, n_maxatom=n_maxatom, n_atombasis=n_atombasis,
                         n_radialbasis=n_radialbasis,
                         center_start=1.0, center_end=radial_cutoff)

    atomic_numbers = jax.random.randint(k_z, (n_atoms,), 1, n_maxatom + 1, dtype=jnp.int32)
    positions = jax.random.normal(k_pos, (n_atoms, 3), dtype=jnp.float32) * 3.0
    idx_i = jax.random.randint(k_i, (n_pairs,), 0, n_atoms, dtype=jnp.int32)
    idx_j = jax.random.randint(k_j, (n_pairs,), 0, n_atoms, dtype=jnp.int32)
    idx_u = jax.random.randint(k_u, (n_pairs_uv,), 0, n_atoms, dtype=jnp.int32)
    idx_v = jax.random.randint(k_v, (n_pairs_uv,), 0, n_atoms, dtype=jnp.int32)

    outs = input_physnet_forward(atomic_numbers, positions, idx_i, idx_j, params,
                                 idx_u=idx_u, idx_v=idx_v,
                                 radial_cutoff=radial_cutoff)
    outs = jax.block_until_ready(outs)

    refs = _reference(atomic_numbers, positions, idx_i, idx_j, idx_u, idx_v,
                      params, radial_cutoff, float(n_atombasis))
    for got, ref in zip(outs, refs):
        assert got.shape == ref.shape, (got.shape, ref.shape)
        err = float(jnp.max(jnp.abs(got - ref)))
        assert jnp.allclose(got, ref, atol=1e-4, rtol=1e-4), err

    # idx_u=None path: long-range kernel skipped, distances_uv == distances.
    outs_none = jax.block_until_ready(
        input_physnet_forward(atomic_numbers, positions, idx_i, idx_j, params,
                              radial_cutoff=radial_cutoff))
    assert jnp.allclose(outs_none[4], outs_none[1])

    print("KERNEL_OK")
</pallas_src>

<mosaic_0001>
module attributes {stable_mosaic.version = 11 : i64} {
  func.func @_features_kernel(%arg0: i32, %arg1: memref<16x1xi32, #tpu.memory_space<vmem>>, %arg2: memref<95x32xf32, #tpu.memory_space<vmem>>, %arg3: memref<16x32xf32, #tpu.memory_space<vmem>>) attributes {dimension_semantics = [#tpu.dimension_semantics<parallel>], iteration_bounds = array<i64: 1>, scalar_prefetch = 0 : i64, scratch_operands = 0 : i64, tpu.core_type = #tpu.core_type<tc>, window_params = [{transform_indices = @transform_0, window_bounds = array<i64: 16, 1>}, {pipeline_mode = #tpu.pipeline_mode<synchronous>, transform_indices = @transform_1, window_bounds = array<i64: 95, 32>}, {transform_indices = @transform_2, window_bounds = array<i64: 16, 32>}]} {
    %c0 = arith.constant 0 : index
    %c0_0 = arith.constant 0 : index
    %0 = vector.load %arg1[%c0, %c0_0] : memref<16x1xi32, #tpu.memory_space<vmem>>, vector<16x1xi32>
    %1 = tpu.iota {dimensions = array<i32: 1>} : vector<16x95xi32>
    %2 = vector.broadcast %0 : vector<16x1xi32> to vector<16x95xi32>
    %3 = arith.cmpi eq, %1, %2 : vector<16x95xi32>
    %4 = arith.extui %3 : vector<16x95xi1> to vector<16x95xi32>
    %5 = arith.sitofp %4 : vector<16x95xi32> to vector<16x95xf32>
    %c0_1 = arith.constant 0 : index
    %c0_2 = arith.constant 0 : index
    %6 = vector.load %arg2[%c0_1, %c0_2] : memref<95x32xf32, #tpu.memory_space<vmem>>, vector<95x32xf32>
    %cst = arith.constant dense<0.000000e+00> : vector<16x32xf32>
    %7 = tpu.matmul %5, %6, %cst {dimension_numbers = #tpu.dot_dimension_numbers<[1], [0], [0], [1], [0, 0, 1, 1], [], []>} : vector<16x95xf32>, vector<95x32xf32>, vector<16x32xf32> -> vector<16x32xf32>
    %8 = arith.mulf %7, %7 : vector<16x32xf32>
    %cst_3 = arith.constant dense<0.000000e+00> : vector<16xf32>
    %9 = vector.multi_reduction <add>, %8, %cst_3 [1] : vector<16x32xf32> to vector<16xf32>
    %10 = vector.shape_cast %9 : vector<16xf32> to vector<16x1xf32>
    %11 = math.sqrt %10 : vector<16x1xf32>
    %cst_4 = arith.constant 1.000000e-07 : f32
    %12 = vector.broadcast %cst_4 : f32 to vector<16x1xf32>
    %13 = arith.addf %11, %12 : vector<16x1xf32>
    %cst_5 = arith.constant 3.200000e+01 : f32
    %14 = vector.broadcast %cst_5 : f32 to vector<16x1xf32>
    %15 = arith.divf %14, %13 : vector<16x1xf32>
    %cst_6 = arith.constant 1.000000e+00 : f32
    %16 = vector.broadcast %cst_6 : f32 to vector<16x1xf32>
    %17 = arith.minimumf %16, %15 : vector<16x1xf32>
    %18 = vector.broadcast %17 : vector<16x1xf32> to vector<16x32xf32>
    %19 = arith.mulf %7, %18 : vector<16x32xf32>
    %c0_7 = arith.constant 0 : index
    %c0_8 = arith.constant 0 : index
    %20 = vector.load %arg3[%c0_7, %c0_8] : memref<16x32xf32, #tpu.memory_space<vmem>>, vector<16x32xf32>
    tpu.vector_store %arg3[%c0_7, %c0_8], %19 {strides = array<i32>} : memref<16x32xf32, #tpu.memory_space<vmem>>, vector<16x32xf32>,
    return
  }
  func.func @transform_0(%arg0: i32) -> (i32, i32) {
    %c0_i32 = arith.constant 0 : i32
    %c0_i32_0 = arith.constant 0 : i32
    return %arg0, %c0_i32 : i32, i32
  }
  func.func @transform_1(%arg0: i32) -> (i32, i32) {
    %c0_i32 = arith.constant 0 : i32
    %c0_i32_0 = arith.constant 0 : i32
    %c0_i32_1 = arith.constant 0 : i32
    return %c0_i32, %c0_i32_0 : i32, i32
  }
  func.func @transform_2(%arg0: i32) -> (i32, i32) {
    %c0_i32 = arith.constant 0 : i32
    %c0_i32_0 = arith.constant 0 : i32
    return %arg0, %c0_i32 : i32, i32
  }
}

</mosaic_0001>

<llo_original>
// kernel: tpu_custom_call.1
$region0: #{tpu_custom_call.1}
  #allocation0 [shape = 'u32[]', space=smem, size = 0x4, offset = 0x4, fixed_abs, tag = 'smem constant byte address 0x4 - core index']
  #allocation1 [shape = 'u32[144,128]{1,0:T(1,128)}', space=vmem, size = 0x12000, scoped, tag = 'internal scratch']
  %s0 = inlined_call_operand.vmem [shape: s32[16,1], index: 0, kind: input, shape index: {}]
  %s1 = inlined_call_operand.vmem [shape: f32[95,32], index: 1, kind: input, shape index: {}]
  %s2 = inlined_call_operand.hbm [shape: f32[16,32], index: 2, kind: output, shape index: {}]
  %s3 = sld [smem:[#allocation0]]
  $region18: #{tpu_custom_call.1} parent=0
    _
  %s5 = ssub.s32 1, %s3
  %s6 = scalar_select 0, %s5, %s3
  $region1: #{tpu_custom_call.1} parent=0
    #allocation2 [shape = 'u8[8192]{0}', space=vmem, size = 0x2000, scoped, tag = 'output window, operand 0, single buffered']
    #allocation3 [shape = 's32[1]{0}', space=sflag, size = 0x4, scoped, tag = 'scoped memory for tpu_custom_call.1']
    %7 = vsyncpa [#allocation3], 0
    // Predicated region
    $region2: #{tpu_custom_call.1} parent=1 // pred_check
      _
    $region3: #{tpu_custom_call.1} parent=1 // pred_check_branch
      %9 = sbr.rel (0) target = $region5
    $region4: #{tpu_custom_call.1} parent=1 // pred_region
      _
    $region5: #{tpu_custom_call.1} parent=1 // pred_fallthru
      _
    // Predicated region
    $region6: #{tpu_custom_call.1} parent=1 // pred_check
      _
    $region7: #{tpu_custom_call.1} parent=1 // pred_check_branch
      %11 = sbr.rel (0) target = $region9
    $region8: #{tpu_custom_call.1} parent=1 // pred_region
      _
    $region9: #{tpu_custom_call.1} parent=1 // pred_fallthru
      _
    %v12 = vld [vmem:[%s0] sm:$0xff]
    %v13 = vld [vmem:[%s0 + $0x8] sm:$0xff]
    %v14 = vlaneseq
    %v15 = vand.u32 %v14, 127
    %16 = vset.pattern.permute.xlu0 0
    %17 = vperm.xlu0 %16, %v12
    %v18 = vpop.permute.xlu0 %17
    %19 = vset.pattern.permute.xlu0 0
    %20 = vperm.xlu0 %19, %v13
    %v21 = vpop.permute.xlu0 %20
    %vm22 = vcmp.eq.s32.totalorder %v15, %v18
    %vm23 = vcmp.eq.s32.totalorder %v15, %v21
    %v24 = vsel %vm22, 1, 0
    %v25 = vsel %vm23, 1, 0
    %v26 = vcvt.s32.f32 %v24
    %v27 = vcvt.s32.f32 %v25
    %v28 = vld [vmem:[%s1] sm:$0xff]
    %v29 = vld [vmem:[%s1 + $0x8] sm:$0xff]
    %v30 = vld [vmem:[%s1 + $0x10] sm:$0xff]
    %v31 = vld [vmem:[%s1 + $0x18] sm:$0xff]
    %v32 = vld [vmem:[%s1 + $0x20] sm:$0xff]
    %v33 = vld [vmem:[%s1 + $0x28] sm:$0xff]
    %v34 = vld [vmem:[%s1 + $0x30] sm:$0xff]
    %v35 = vld [vmem:[%s1 + $0x38] sm:$0xff]
    %v36 = vld [vmem:[%s1 + $0x40] sm:$0xff]
    %v37 = vld [vmem:[%s1 + $0x48] sm:$0xff]
    %v38 = vld [vmem:[%s1 + $0x50] sm:$0xff]
    %v39 = vld [vmem:[%s1 + $0x58] sm:$0x7f]
    %vm40 = vcmask 777216
    %v42 = vsel %vm40, %v26, 0
    %v45 = vsel %vm40, %v27, 0
    %vm47 = vcmask 1046528
    %v49 = vsel %vm47, %v39, 0
    %51 = vmatprep.subr.mxu0 0.0
    %52 = vmatpush1.msra.mxu0 0.0
    %53 = vmatprep.subr.mxu0 0.0
    %54 = vmatpush1.msra.mxu0 0.0
    %55 = vmatprep.subr.mxu0 0.0
    %56 = vmatpush1.msra.mxu0 0.0
    %57 = vmatprep.subr.mxu0 0.0
    %58 = vmatpush1.msra.mxu0 0.0
    %59 = vmatprep.subr.mxu0 0.0
    %60 = vmatpush1.msra.mxu0 %v49
    %61 = vmatprep.subr.mxu0 0.0
    %62 = vmatpush1.msra.mxu0 %v38
    %63 = vmatprep.subr.mxu0 0.0
    %64 = vmatpush1.msra.mxu0 %v37
    %65 = vmatprep.subr.mxu0 0.0
    %66 = vmatpush1.msra.mxu0 %v36
    %67 = vmatprep.subr.mxu0 0.0
    %68 = vmatpush1.msra.mxu0 %v35
    %69 = vmatprep.subr.mxu0 0.0
    %70 = vmatpush1.msra.mxu0 %v34
    %71 = vmatprep.subr.mxu0 0.0
    %72 = vmatpush1.msra.mxu0 %v33
    %73 = vmatprep.subr.mxu0 0.0
    %74 = vmatpush1.msra.mxu0 %v32
    %75 = vmatprep.subr.mxu0 0.0
    %76 = vmatpush1.msra.mxu0 %v31
    %77 = vmatprep.subr.mxu0 0.0
    %78 = vmatpush1.msra.mxu0 %v30
    %79 = vmatprep.subr.mxu0 0.0
    %80 = vmatpush1.msra.mxu0 %v29
    %81 = vmatprep.subr.mxu0 0.0
    %82 = vmatpush1.msra.mxu0 %v28
    %83 = vmatprep.subr.mxu0 0.0
    %84 = vmatpush2.msra.mxu0 0.0
    %85 = vmatprep.subr.mxu0 0.0
    %86 = vmatpush2.msra.mxu0 0.0
    %87 = vmatprep.subr.mxu0 0.0
    %88 = vmatpush2.msra.mxu0 0.0
    %89 = vmatprep.subr.mxu0 0.0
    %90 = vmatpush2.msra.mxu0 0.0
    %91 = vmatprep.subr.mxu0 0.0
    %92 = vmatpush2.msra.mxu0 0.0
    %93 = vmatprep.subr.mxu0 0.0
    %94 = vmatpush2.msra.mxu0 0.0
    %95 = vmatprep.subr.mxu0 0.0
    %96 = vmatpush2.msra.mxu0 0.0
    %97 = vmatprep.subr.mxu0 0.0
    %98 = vmatpush2.msra.mxu0 0.0
    %99 = vmatprep.subr.mxu0 0.0
    %100 = vmatpush2.msra.mxu0 0.0
    %101 = vmatprep.subr.mxu0 0.0
    %102 = vmatpush2.msra.mxu0 0.0
    %103 = vmatprep.subr.mxu0 0.0
    %104 = vmatpush2.msra.mxu0 0.0
    %105 = vmatprep.subr.mxu0 0.0
    %106 = vmatpush2.msra.mxu0 0.0
    %107 = vmatprep.subr.mxu0 0.0
    %108 = vmatpush2.msra.mxu0 0.0
    %109 = vmatprep.subr.mxu0 0.0
    %110 = vmatpush2.msra.mxu0 0.0
    %111 = vmatprep.subr.mxu0 0.0
    %112 = vmatpush2.msra.mxu0 0.0
    %113 = vmatprep.subr.mxu0 0.0
    %114 = vmatpush2.msra.mxu0 0.0
    %115 = vmatprep.mubr.f32.mxu0 0.0
    %116 = vmatmul.mubr.f32.gmra.mxu0 %v42
    %v117 = vpop.f32.mrf.mxu0
    %v118 = vadd.f32 0.0, %v117
    %v119 = vpop.f32.mrf.mxu0
    %120 = vmatprep.mubr.f32.mxu0 0.0
    %121 = vmatmul.mubr.f32.gmra.mxu0 %v45
    %v122 = vpop.f32.mrf.mxu0
    %v123 = vadd.f32 0.0, %v122
    %v124 = vpop.f32.mrf.mxu0
    %125 = vdwg.mxu0
    %v126 = vmul.f32 %v118, %v118
    %v127 = vmul.f32 %v123, %v123
    %vm128 = vcmask 261120
    %v129 = vsel %vm128, %v126, 0.0
    %130 = vadd.xlane.f32.xlu0 %v129
    %v131 = vpop.xlane.xlu0 %130
    %v132 = vsel %vm128, %v127, 0.0
    %133 = vadd.xlane.f32.xlu0 %v132
    %v134 = vpop.xlane.xlu0 %133
    %v135 = vrsqrt.pop %v131
    %v136 = vmul.f32 %v131, %v135
    %vm137 = vcmp.eq.f32.partialorder %v131, inf
    %v138 = vsel %vm137, %v131, %v136
    %vm139 = vcmp.eq.f32.partialorder %v131, 0.0
    %v140 = vand.u32 %v131, 2147483648
    %v141 = vsel %vm139, %v140, %v138
    %v142 = vrsqrt.pop %v134
    %v143 = vmul.f32 %v134, %v142
    %vm144 = vcmp.eq.f32.partialorder %v134, inf
    %v145 = vsel %vm144, %v134, %v143
    %vm146 = vcmp.eq.f32.partialorder %v134, 0.0
    %v147 = vand.u32 %v134, 2147483648
    %v148 = vsel %vm146, %v147, %v145
    %v149 = vadd.f32 %v141, 1e-07
    %v150 = vadd.f32 %v148, 1e-07
    %v151 = vrcp.pop %v149
    %v152 = vmul.f32 32.0, %v151
    %v153 = vrcp.pop %v150
    %v154 = vmul.f32 32.0, %v153
    %v155 = vmin.f32 %v152, 1.0
    %v156 = vmin.f32 %v154, 1.0
    %v157 = vmul.f32 %v118, %v155
    %v158 = vmul.f32 %v123, %v156
    %159 = vst.msk [vmem:[#allocation2] sm:$0xff] %vm128, %v157
    %160 = vst.msk [vmem:[#allocation2 + $0x8] sm:$0xff] %vm128, %v158
    // Predicated region
    $region10: #{tpu_custom_call.1} parent=1 // pred_check
      _
    $region11: #{tpu_custom_call.1} parent=1 // pred_check_branch
      %162 = sbr.rel (0) target = $region13
    $region12: #{tpu_custom_call.1} parent=1 // pred_region
      %s164 = ssub.s32 256, 256
      %165 = vsyncadd [#allocation3], %s164
      %s166 = sshll.u32 [#allocation2], 4
      %s167 = int_to_ptr.vmem [resolvable:$true] %s166
      %172 = dma.vmem_to_hbm [thread:$0]  %s167, 256, %s2, [#allocation3], 128, 128, 8
    $region13: #{tpu_custom_call.1} parent=1 // pred_fallthru
      _
    // Predicated region
    $region14: #{tpu_custom_call.1} parent=1 // pred_check
      _
    $region15: #{tpu_custom_call.1} parent=1 // pred_check_branch
      %174 = sbr.rel (0) target = $region17
    $region16: #{tpu_custom_call.1} parent=1 // pred_region
      %175 = dma.done [#allocation3], 256
    $region17: #{tpu_custom_call.1} parent=1 // pred_fallthru
      _
    %176 = vsyncpa [#allocation3], 1

</llo_original>
